<compile_context>
chip_gen: v7x
topology: tpu7x:2x2x1
jax: 0.10.0
libtpu: 0.0.40
codegen_flags: <defaults>
</compile_context>

<pallas_src>
import functools

import jax
import jax.numpy as jnp
from jax import lax
from jax.experimental import pallas as pl
from jax.experimental.pallas import tpu as pltpu

_LANE = 128
_SUBLANE = 8
_SEG_UNROLL = 32      # max segments handled per grid step (bounds unrolled code size)
_SEG_CHUNK = 8        # segments up-cast/summed per inner chunk (bounds f32 temporaries)


def _round_up(x, m):
    return (x + m - 1) // m * m


def _slab_bytes(rows, cols, itemsize):
    """VMEM bytes of a (rows, cols) slab after (sublane, lane) padding for this dtype."""
    packing = max(1, 4 // max(1, itemsize))           # f32: 1, bf16: 2, int8/fp8: 4
    return (_round_up(max(rows, 1), _SUBLANE * packing)
            * _round_up(max(cols, 1), _LANE) * itemsize)


def _step_bytes(tb, ts, tf, in_isz, out_isz):
    """Scoped-VMEM footprint of one grid step."""
    in_bytes = tb * _slab_bytes(ts, tf, in_isz)       # (tb, ts, tf) input block
    out_bytes = _slab_bytes(tb, tf, out_isz)          # (tb, tf) lane-dense output block
    acc_bytes = _slab_bytes(tb, tf, 4)                # f32 accumulator scratch
    # f32 up-cast of one (tb, <=8, tf) segment chunk (compiler temporaries/spills)
    tmp_bytes = tb * _slab_bytes(min(ts, _SEG_CHUNK), tf, 4) if in_isz < 4 else 0
    return 2 * in_bytes + 2 * out_bytes + acc_bytes + tmp_bytes   # in/out double-buffered


def _vmem_budget():
    """(vmem_limit_bytes, usable_step_bytes) sized to the local TPU generation."""
    phys = 64 << 20
    try:
        phys = int(getattr(pltpu.get_tpu_info(), "vmem_capacity_bytes", phys))
    except Exception:
        pass
    # v5e/v6e (128 MiB physical) -> 64 MiB scoped; v7x-class (64 MiB) -> 40 MiB scoped.
    limit = max(32 << 20, min(64 << 20, phys - (24 << 20)))
    # Step budget: headroom for Mosaic internals, capped where the HBM roofline already
    # plateaus (multi-MiB DMAs) to keep unrolled code size / compile time in check.
    usable = min(limit - (8 << 20), 36 << 20)
    return limit, usable


def _pick_tiles(B, S, F, in_isz, out_isz, usable):
    """Choose (tb, ts, tf). Returns None when no legal tile fits the budget."""
    tb_min = B if B < _SUBLANE else _SUBLANE

    def fits(tb, ts, tf):
        return _step_bytes(tb, ts, tf, in_isz, out_isz) <= usable

    # Segment-chunk candidates: a block's second-to-last dim must be a multiple of 8
    # or equal to the full extent S.
    # TODO(synk): for S < 8 a Squeezed 1-segment block (tb on sublanes) would avoid the
    # pad-to-8 VMEM waste; kept on the proven dense 3-D block path for robustness.
    ts_cands = [min(S, _SEG_UNROLL)]
    for c in (16, 8):
        if S > c:
            ts_cands.append(c)

    ts, tf = ts_cands[0], F          # prefer the full, contiguous feature row
    if not fits(tb_min, ts, tf):
        chosen = None
        for ts_c in ts_cands:                         # shrink the segment chunk first
            if fits(tb_min, ts_c, F):
                chosen = (ts_c, F)
                break
        if chosen is None and F > _LANE:              # then tile the lane axis
            tf_hi = (F // _LANE) * _LANE
            for ts_c in ts_cands:
                per_lane_blk = _step_bytes(tb_min, ts_c, _LANE, in_isz, out_isz)
                if per_lane_blk > usable:
                    continue
                tf_c = min(tf_hi, max(_LANE, (usable // per_lane_blk) * _LANE))
                while tf_c > _LANE and not fits(tb_min, ts_c, tf_c):
                    tf_c -= _LANE
                if fits(tb_min, ts_c, tf_c):
                    chosen = (ts_c, tf_c)
                    break
        if chosen is None:
            return None
        ts, tf = chosen

    # Batch tile: the largest multiple of 8 (or full B) that still fits.
    if fits(B, ts, tf):
        tb = B
    else:                                             # here B > 8 and fits(8) holds
        k_lo, k_hi = 1, max(1, B // _SUBLANE)
        while k_lo < k_hi:
            k_mid = (k_lo + k_hi + 1) // 2
            if fits(k_mid * _SUBLANE, ts, tf):
                k_lo = k_mid
            else:
                k_hi = k_mid - 1
        tb = k_lo * _SUBLANE
    return int(tb), int(ts), int(tf)


def _ensure_parallel_steps(B, F, tb, tf, total_in_bytes):
    """v7x has 2 TensorCores: give the 'parallel' axes >=2 (>=4 for big inputs) steps,
    while keeping each step's DMA multi-MiB (gated on total input size)."""
    if total_in_bytes >= (8 << 20):
        target = 4
    elif total_in_bytes >= (2 << 20):
        target = 2
    else:
        return tb, tf
    while pl.cdiv(B, tb) * pl.cdiv(F, tf) < target:
        if tb > _SUBLANE:
            new_tb = _round_up(pl.cdiv(tb, 2), _SUBLANE)
            if new_tb < tb:
                tb = new_tb
                continue
        if tf > _LANE:
            new_tf = max(_LANE, _round_up(pl.cdiv(tf, 2), _LANE))
            if new_tf < tf:
                tf = new_tf
                continue
        break
    return tb, tf


def _consensus_kernel(x_ref, o_ref, acc_ref, *, s_total, ts):
    """Running mean over the segment axis.

    Grid = (batch tiles, feature tiles, segment chunks); the segment axis is innermost
    and 'arbitrary', so the f32 accumulator stays resident across it. The reduction is
    chunked so at most a (TB, 8, TF) slice is ever up-cast to f32 (VPU/XLU only, no MXU).
    """
    s = pl.program_id(2)

    @pl.when(s == 0)
    def _():
        acc_ref[...] = jnp.zeros_like(acc_ref)

    acc = acc_ref[...]
    base = s * ts
    ragged = (s_total % ts) != 0
    for j0 in range(0, ts, _SEG_CHUNK):               # unrolled, bounded by _SEG_UNROLL
        j1 = min(ts, j0 + _SEG_CHUNK)
        xc = x_ref[:, j0:j1, :].astype(jnp.float32)   # (tb, <=8, tf) chunk
        if ragged:
            # Last segment block may extend past S: zero out-of-range segments
            # (jnp.where, not multiply, so garbage NaNs cannot leak into valid rows).
            seg = base + j0 + lax.broadcasted_iota(jnp.int32, xc.shape, 1)
            xc = jnp.where(seg < s_total, xc, 0.0)
        acc = acc + jnp.sum(xc, axis=1)
    acc_ref[...] = acc

    @pl.when(s == pl.num_programs(2) - 1)
    def _():
        o_ref[...] = (acc_ref[...] * jnp.float32(1.0 / s_total)).astype(o_ref.dtype)


def consensus_module(x, *, dim=1, force_pallas=False,
                     min_pallas_bytes=1 << 20, tb=None, tf=None):
    """TSN segmental consensus: input.mean(dim=dim, keepdim=True)."""
    if x.ndim != 3 or dim != 1 or x.shape[1] == 0:
        # TODO(synk): only the (batch, segments, features) / dim=1 layout gets a
        # dedicated kernel; other ranks/dims use XLA's fused reduction.
        return jnp.mean(x, axis=dim, keepdims=True)

    B, S, F = x.shape
    in_isz = jnp.dtype(x.dtype).itemsize
    # Match jnp.mean's promotion so kernel and fallback paths agree
    # (PyTorch .mean rejects integer inputs; jnp promotes them to float32).
    out_dtype = x.dtype if jnp.issubdtype(x.dtype, jnp.floating) else jnp.float32
    out_isz = jnp.dtype(out_dtype).itemsize
    total_in_bytes = B * S * F * in_isz

    # Tiny inputs: launch + per-step overhead dominates a memory-bound mean.
    if total_in_bytes < min_pallas_bytes and not force_pallas:
        return jnp.mean(x, axis=1, keepdims=True)

    vmem_limit, usable = _vmem_budget()
    auto = _pick_tiles(B, S, F, in_isz, out_isz, usable)
    if auto is None:
        # TODO(synk): pathologically wide rows that cannot be lane-tiled within VMEM.
        return jnp.mean(x, axis=1, keepdims=True)
    tb_blk, ts, tf_blk = auto

    if tb is None and tf is None:
        tb_blk, tf_blk = _ensure_parallel_steps(B, F, tb_blk, tf_blk, total_in_bytes)
    else:
        # Sanitize manual overrides: keep blocks legal (sublane/lane aligned or full
        # extent) and re-check the VMEM budget; fall back to auto tiles if they blow it.
        if tb is not None:
            tb_blk = B if int(tb) >= B else max(_SUBLANE, _round_up(int(tb), _SUBLANE))
            tb_blk = B if tb_blk >= B else tb_blk
        if tf is not None:
            tf_blk = F if int(tf) >= F else max(_LANE, _round_up(int(tf), _LANE))
            tf_blk = F if tf_blk >= F else tf_blk
        if _step_bytes(tb_blk, ts, tf_blk, in_isz, out_isz) > usable:
            tb_blk, ts, tf_blk = auto

    grid = (pl.cdiv(B, tb_blk), pl.cdiv(F, tf_blk), pl.cdiv(S, ts))
    kernel = functools.partial(_consensus_kernel, s_total=S, ts=ts)
    cost = pl.CostEstimate(
        flops=B * S * F,                              # ~one add per input element
        transcendentals=0,
        bytes_accessed=total_in_bytes + B * F * out_isz,
    )

    out2d = pl.pallas_call(
        kernel,
        out_shape=jax.ShapeDtypeStruct((B, F), out_dtype),
        grid_spec=pltpu.PrefetchScalarGridSpec(
            num_scalar_prefetch=0,
            grid=grid,
            in_specs=[pl.BlockSpec((tb_blk, ts, tf_blk), lambda b, f, s: (b, s, f))],
            out_specs=pl.BlockSpec((tb_blk, tf_blk), lambda b, f, s: (b, f)),
            scratch_shapes=[pltpu.VMEM((tb_blk, tf_blk), jnp.float32)],
        ),
        compiler_params=pltpu.CompilerParams(
            dimension_semantics=("parallel", "parallel", "arbitrary"),
            vmem_limit_bytes=vmem_limit,
        ),
        cost_estimate=cost,
    )(x)
    # Layout-only reshape back to the keepdim=True form (B, 1, F).
    return out2d.reshape(B, 1, F)


if __name__ == "__main__":
    key = jax.random.PRNGKey(0)

    # 1) Spec-sized input (batch=2, segments=8, features=32), forced through the kernel.
    x_small = jax.random.normal(key, (2, 8, 32), dtype=jnp.float32)
    out_small = jax.block_until_ready(consensus_module(x_small, force_pallas=True))
    ref_small = jnp.mean(x_small, axis=1, keepdims=True)
    assert out_small.shape == (2, 1, 32), out_small.shape
    assert jnp.allclose(out_small, ref_small, atol=1e-6, rtol=1e-6), "mismatch (small)"

    # 2) Batch + feature tiling with a partial tail batch tile (manual tile overrides).
    x_big = jax.random.normal(jax.random.PRNGKey(0), (20, 12, 256), dtype=jnp.float32)
    out_big = jax.block_until_ready(
        consensus_module(x_big, force_pallas=True, tb=8, tf=128))
    ref_big = jnp.mean(x_big, axis=1, keepdims=True)
    assert out_big.shape == (20, 1, 256), out_big.shape
    assert jnp.allclose(out_big, ref_big, atol=1e-5, rtol=1e-5), "mismatch (big)"

    # 3) bf16 input exercising the multi-step segment ('arbitrary') axis + f32 accumulator.
    x_seg = jax.random.normal(jax.random.PRNGKey(0), (16, 64, 256), dtype=jnp.bfloat16)
    out_seg = jax.block_until_ready(consensus_module(x_seg, force_pallas=True))
    ref_seg = jnp.mean(x_seg, axis=1, keepdims=True)
    assert out_seg.shape == (16, 1, 256), out_seg.shape
    assert jnp.allclose(out_seg.astype(jnp.float32), ref_seg.astype(jnp.float32),
                        atol=2e-2, rtol=2e-2), "mismatch (segments)"

    print("KERNEL_OK")
</pallas_src>

<mosaic_0001>
module attributes {stable_mosaic.version = 11 : i64} {
  func.func @_consensus_kernel(%arg0: i32, %arg1: i32, %arg2: i32, %arg3: memref<2x8x32xf32, #tpu.memory_space<vmem>>, %arg4: memref<2x32xf32, #tpu.memory_space<vmem>>, %arg5: memref<2x32xf32, #tpu.memory_space<vmem>>) attributes {dimension_semantics = [#tpu.dimension_semantics<parallel>, #tpu.dimension_semantics<parallel>, #tpu.dimension_semantics<arbitrary>], iteration_bounds = array<i64: 1, 1, 1>, scalar_prefetch = 0 : i64, scratch_operands = 1 : i64, tpu.core_type = #tpu.core_type<tc>, window_params = [{transform_indices = @transform_0, window_bounds = array<i64: 2, 8, 32>}, {transform_indices = @transform_1, window_bounds = array<i64: 2, 32>}]} {
    %c0_i32 = arith.constant 0 : i32
    %0 = arith.cmpi eq, %arg2, %c0_i32 : i32
    %1 = arith.extui %0 : i1 to i32
    %c0_i32_0 = arith.constant 0 : i32
    %2 = arith.cmpi ne, %1, %c0_i32_0 : i32
    scf.if %2 {
      %cst_9 = arith.constant 0.000000e+00 : f32
      %11 = vector.broadcast %cst_9 : f32 to vector<2x32xf32>
      %c0_10 = arith.constant 0 : index
      %c0_11 = arith.constant 0 : index
      %12 = vector.load %arg5[%c0_10, %c0_11] : memref<2x32xf32, #tpu.memory_space<vmem>>, vector<2x32xf32>
      tpu.vector_store %arg5[%c0_10, %c0_11], %11 {strides = array<i32>} : memref<2x32xf32, #tpu.memory_space<vmem>>, vector<2x32xf32>,
    } else {
    }
    %c0 = arith.constant 0 : index
    %c0_1 = arith.constant 0 : index
    %3 = vector.load %arg5[%c0, %c0_1] : memref<2x32xf32, #tpu.memory_space<vmem>>, vector<2x32xf32>
    %c0_2 = arith.constant 0 : index
    %c0_3 = arith.constant 0 : index
    %c0_4 = arith.constant 0 : index
    %4 = vector.load %arg3[%c0_2, %c0_3, %c0_4] : memref<2x8x32xf32, #tpu.memory_space<vmem>>, vector<2x8x32xf32>
    %cst = arith.constant dense<0.000000e+00> : vector<2x32xf32>
    %5 = vector.multi_reduction <add>, %4, %cst [1] : vector<2x8x32xf32> to vector<2x32xf32>
    %6 = arith.addf %3, %5 : vector<2x32xf32>
    %c0_5 = arith.constant 0 : index
    %c0_6 = arith.constant 0 : index
    %7 = vector.load %arg5[%c0_5, %c0_6] : memref<2x32xf32, #tpu.memory_space<vmem>>, vector<2x32xf32>
    tpu.vector_store %arg5[%c0_5, %c0_6], %6 {strides = array<i32>} : memref<2x32xf32, #tpu.memory_space<vmem>>, vector<2x32xf32>,
    %c0_i32_7 = arith.constant 0 : i32
    %8 = arith.cmpi eq, %arg2, %c0_i32_7 : i32
    %9 = arith.extui %8 : i1 to i32
    %c0_i32_8 = arith.constant 0 : i32
    %10 = arith.cmpi ne, %9, %c0_i32_8 : i32
    scf.if %10 {
      %c0_9 = arith.constant 0 : index
      %c0_10 = arith.constant 0 : index
      %11 = vector.load %arg5[%c0_9, %c0_10] : memref<2x32xf32, #tpu.memory_space<vmem>>, vector<2x32xf32>
      %cst_11 = arith.constant 1.250000e-01 : f32
      %12 = vector.broadcast %cst_11 : f32 to vector<2x32xf32>
      %13 = arith.mulf %11, %12 : vector<2x32xf32>
      %c0_12 = arith.constant 0 : index
      %c0_13 = arith.constant 0 : index
      %14 = vector.load %arg4[%c0_12, %c0_13] : memref<2x32xf32, #tpu.memory_space<vmem>>, vector<2x32xf32>
      tpu.vector_store %arg4[%c0_12, %c0_13], %13 {strides = array<i32>} : memref<2x32xf32, #tpu.memory_space<vmem>>, vector<2x32xf32>,
    } else {
    }
    return
  }
  func.func @transform_0(%arg0: i32, %arg1: i32, %arg2: i32) -> (i32, i32, i32) {
    %c0_i32 = arith.constant 0 : i32
    return %arg0, %arg2, %arg1 : i32, i32, i32
  }
  func.func @transform_1(%arg0: i32, %arg1: i32, %arg2: i32) -> (i32, i32) {
    %c0_i32 = arith.constant 0 : i32
    return %arg0, %arg1 : i32, i32
  }
}

</mosaic_0001>

<llo_original>
// kernel: tpu_custom_call.1
$region0: #{tpu_custom_call.1}
  #allocation0 [shape = 'u32[]', space=smem, size = 0x4, offset = 0x4, fixed_abs, tag = 'smem constant byte address 0x4 - core index']
  #allocation1 [shape = 'u32[144,128]{1,0:T(1,128)}', space=vmem, size = 0x12000, scoped, tag = 'internal scratch']
  #allocation2 [shape = 'f32[2,32]{1,0:T(2,128)}', space=vmem, size = 0x400, scoped, tag = 'scratch operand']
  %s0 = inlined_call_operand.hbm [shape: f32[2,8,32], index: 0, kind: input, shape index: {}]
  %s1 = inlined_call_operand.hbm [shape: f32[2,32], index: 1, kind: output, shape index: {}]
  %s2 = sld [smem:[#allocation0]]
  $region26: #{tpu_custom_call.1} parent=0
    _
  %s4 = ssub.s32 1, %s2
  %s5 = scalar_select 0, %s4, %s2
  $region1: #{tpu_custom_call.1} parent=0
    #allocation3 [shape = 'u8[8192]{0}', space=vmem, size = 0x2000, scoped, tag = 'input window, operand 0, single buffered']
    #allocation4 [shape = 's32[1]{0}', space=sflag, size = 0x4, scoped, tag = 'scoped memory for tpu_custom_call.1']
    #allocation5 [shape = 's32[1]{0}', space=sflag, size = 0x4, scoped, tag = 'scoped memory for tpu_custom_call.1']
    #allocation6 [shape = 'u8[1024]{0}', space=vmem, size = 0x400, scoped, tag = 'output window, operand 0, single buffered']
    %6 = vsyncpa [#allocation4], 0
    %7 = vsyncpa [#allocation5], 0
    // Predicated region
    $region2: #{tpu_custom_call.1} parent=1 // pred_check
      _
    $region3: #{tpu_custom_call.1} parent=1 // pred_check_branch
      %9 = sbr.rel (0) target = $region5
    $region4: #{tpu_custom_call.1} parent=1 // pred_region
      %s11 = ssub.s32 256, 256
      %12 = vsyncadd [#allocation4], %s11
      %s13 = sshll.u32 [#allocation3], 4
      %s14 = int_to_ptr.vmem [resolvable:$true] %s13
      %19 = dma.hbm_to_vmem [thread:$0]  %s0, 256, %s14, [#allocation4], 128, 128, 8
    $region5: #{tpu_custom_call.1} parent=1 // pred_fallthru
      _
    // Predicated region
    $region6: #{tpu_custom_call.1} parent=1 // pred_check
      _
    $region7: #{tpu_custom_call.1} parent=1 // pred_check_branch
      %21 = sbr.rel (0) target = $region9
    $region8: #{tpu_custom_call.1} parent=1 // pred_region
      %22 = dma.done [#allocation4], 256
    $region9: #{tpu_custom_call.1} parent=1 // pred_fallthru
      _
    %p23 = scmp.eq.s32.totalorder 0, 0
    // Predicated region
    $region10: #{tpu_custom_call.1} parent=1 // pred_check
      %p24 = pneg %p23
    $region11: #{tpu_custom_call.1} parent=1 // pred_check_branch
      %26 = sbr.rel (%p24) target = $region13
    $region12: #{tpu_custom_call.1} parent=1 // pred_region
      %vm27 = vcmask 254976
      %28 = vst.msk [vmem:[#allocation2] sm:$0x3] %vm27, 0.0
    $region13: #{tpu_custom_call.1} parent=1 // pred_fallthru
      _
    %v29 = vld [vmem:[#allocation2] sm:$0x3]
    %v30 = vld [vmem:[#allocation3] sm:$0xff]
    %v31 = vld [vmem:[#allocation3 + $0x8] sm:$0xff]
    %vm32 = vcmask 261120
    %v33 = vsel %vm32, %v30, 0.0
    %v34 = vrot.slane %v33, 4
    %v35 = vadd.f32 %v33, %v34
    %v36 = vrot.slane %v35, 2
    %v37 = vadd.f32 %v35, %v36
    %v38 = vrot.slane %v37, 1
    %v39 = vadd.f32 %v37, %v38
    %v40 = vsel %vm32, %v31, 0.0
    %v41 = vrot.slane %v40, 4
    %v42 = vadd.f32 %v40, %v41
    %v43 = vrot.slane %v42, 2
    %v44 = vadd.f32 %v42, %v43
    %v45 = vrot.slane %v44, 1
    %v46 = vadd.f32 %v44, %v45
    %vm49 = vcmask 1041409
    %v50 = vsel %vm49, %v46, %v39
    %v52 = vadd.f32 %v29, %v50
    %vm53 = vcmask 254976
    %54 = vst.msk [vmem:[#allocation2] sm:$0x3] %vm53, %v52
    // Predicated region
    $region14: #{tpu_custom_call.1} parent=1 // pred_check
      %p55 = pneg %p23
    $region15: #{tpu_custom_call.1} parent=1 // pred_check_branch
      %57 = sbr.rel (%p55) target = $region17
    $region16: #{tpu_custom_call.1} parent=1 // pred_region
      %v58 = vld [vmem:[#allocation2] sm:$0x3]
      %v59 = vmul.f32 %v58, 0.125
      %60 = vst.msk [vmem:[#allocation6] sm:$0x3] %vm53, %v59
    $region17: #{tpu_custom_call.1} parent=1 // pred_fallthru
      _
    // Predicated region
    $region18: #{tpu_custom_call.1} parent=1 // pred_check
      _
    $region19: #{tpu_custom_call.1} parent=1 // pred_check_branch
      %62 = sbr.rel (0) target = $region21
    $region20: #{tpu_custom_call.1} parent=1 // pred_region
      %s64 = ssub.s32 32, 32
      %65 = vsyncadd [#allocation5], %s64
      %s67 = sshll.u32 [#allocation6], 4
      %s68 = int_to_ptr.vmem [resolvable:$true] %s67
      %70 = dma.vmem_to_hbm [thread:$0]  %s68, 32, %s1, [#allocation5]
    $region21: #{tpu_custom_call.1} parent=1 // pred_fallthru
      _
    // Predicated region
    $region22: #{tpu_custom_call.1} parent=1 // pred_check
      _
    $region23: #{tpu_custom_call.1} parent=1 // pred_check_branch
      %72 = sbr.rel (0) target = $region25
    $region24: #{tpu_custom_call.1} parent=1 // pred_region
      %73 = dma.done [#allocation5], 32
    $region25: #{tpu_custom_call.1} parent=1 // pred_fallthru
      _
    %74 = vsyncpa [#allocation4], 1
    %75 = vsyncpa [#allocation5], 1

</llo_original>
